<compile_context>
chip_gen: v5e
topology: v5e:2x2
jax: 0.10.0
libtpu: 0.0.40
codegen_flags: <defaults>
</compile_context>

<pallas_src>
import functools

import jax
import jax.numpy as jnp
from jax.experimental import pallas as pl
from jax.experimental.pallas import tpu as pltpu


def _round_up(x, m):
    return ((x + m - 1) // m) * m


def _default_num_tiles():
    """One grid step per TensorCore: 1 on v5e/v6e, 2 on v7x."""
    try:
        kind = jax.devices()[0].device_kind.lower()
    except Exception:
        return 1
    return 2 if ("v7" in kind or "tpu7" in kind) else 1


def _mlp_kernel(x_ref, w1b_ref, w2b_ref, o_ref, *, obs, hidden_p):
    # Layer 1: h = relu(x @ W1 + b1).  W1 lives in rows [0, obs) of w1b,
    # b1 in row `obs`.  Static Ref slices -> no VMEM copies.
    h = jnp.dot(x_ref[...], w1b_ref[:obs, :],
                preferred_element_type=jnp.float32)
    h = jnp.maximum(h + w1b_ref[obs, :], 0.0)
    # Layer 2: o = h @ W2 + b2.  W2 occupies rows [0, hidden_p) of w2b; rows
    # beyond the real hidden size are zero, so padded hidden columns (which are
    # themselves exactly 0 after relu(0)) contribute nothing either way.
    # b2 is stored at row `hidden_p` (sublane aligned).
    o = jnp.dot(h, w2b_ref[:hidden_p, :], preferred_element_type=jnp.float32)
    o = o + w2b_ref[hidden_p, :]
    o_ref[...] = o.astype(o_ref.dtype)


def pack_params(w1, b1, w2, b2):
    """Pack weights + biases once at init; reuse the packed arrays every call."""
    obs, H = w1.shape
    A = w2.shape[1]
    obs_p = _round_up(obs + 1, 8)      # room for the b1 row, sublane aligned
    H_p = _round_up(H, 128)
    A_p = _round_up(A, 128)            # lane-dense output dim

    # w1b rows: [W1 ; b1 ; 0-pad]
    w1b = jnp.zeros((obs_p, H_p), jnp.float32)
    w1b = w1b.at[:obs, :H].set(w1.astype(jnp.float32))
    w1b = w1b.at[obs, :H].set(b1.reshape(-1).astype(jnp.float32))

    # w2b rows: [W2 ; 0-pad ; b2 ; 0-pad]   (b2 at row H_p)
    w2b = jnp.zeros((H_p + 8, A_p), jnp.float32)
    w2b = w2b.at[:H, :A].set(w2.astype(jnp.float32))
    w2b = w2b.at[H_p, :A].set(b2.reshape(-1).astype(jnp.float32))

    dims = dict(obs=obs, hidden=H, action=A, obs_p=obs_p, H_p=H_p, A_p=A_p)
    return w1b, w2b, dims


def net_forward(x, w1b, w2b, dims, *, num_tiles=None):
    """Pallas forward pass of Net. x: (B, obs) f32, returns (B, action) f32."""
    B, obs = x.shape
    assert obs == dims["obs"]
    H_p, A_p, A = dims["H_p"], dims["A_p"], dims["action"]

    if num_tiles is None:
        num_tiles = _default_num_tiles()
    num_tiles = int(max(1, min(num_tiles, pl.cdiv(B, 8))))

    if num_tiles == 1:
        # Single tile: block == full array, no batch padding needed at all.
        BT, B_p, x_p = B, B, x
    else:
        BT = _round_up(pl.cdiv(B, num_tiles), 8)
        B_p = BT * num_tiles
        x_p = x if B_p == B else jnp.pad(x, ((0, B_p - B), (0, 0)))

    flops = 2 * B_p * (obs * H_p + H_p * A_p)
    bytes_accessed = (x_p.size + w1b.size + w2b.size + B_p * A_p) * 4

    out_padded = pl.pallas_call(
        functools.partial(_mlp_kernel, obs=obs, hidden_p=H_p),
        out_shape=jax.ShapeDtypeStruct((B_p, A_p), jnp.float32),
        grid=(num_tiles,),
        in_specs=[
            # batch tiles stream; weights are grid-invariant (fetched once)
            pl.BlockSpec((BT, obs), lambda i: (i, 0)),
            pl.BlockSpec(w1b.shape, lambda i: (0, 0)),
            pl.BlockSpec(w2b.shape, lambda i: (0, 0)),
        ],
        out_specs=pl.BlockSpec((BT, A_p), lambda i: (i, 0)),
        compiler_params=pltpu.CompilerParams(
            dimension_semantics=("parallel",)),
        cost_estimate=pl.CostEstimate(
            flops=flops, transcendentals=0, bytes_accessed=bytes_accessed),
    )(x_p, w1b, w2b)

    # Consumers that can read the lane/batch-padded buffer directly (e.g.
    # argmax over the first `action` lanes) should skip this slice to save a
    # launch; padded batch rows hold only b2 and must then be ignored.
    if B_p == B and A_p == A:
        return out_padded
    return out_padded[:B, :A]


def init_params(key, obs_size, hidden_size, action_size):
    """Deterministic PyTorch-style (uniform +-1/sqrt(fan_in)) init."""
    k1, k2, k3, k4 = jax.random.split(key, 4)
    bound1 = 1.0 / jnp.sqrt(jnp.float32(obs_size))
    bound2 = 1.0 / jnp.sqrt(jnp.float32(hidden_size))
    # stored as (in, out) = transpose of PyTorch's (out, in)
    w1 = jax.random.uniform(k1, (obs_size, hidden_size), jnp.float32, -bound1, bound1)
    b1 = jax.random.uniform(k2, (1, hidden_size), jnp.float32, -bound1, bound1)
    w2 = jax.random.uniform(k3, (hidden_size, action_size), jnp.float32, -bound2, bound2)
    b2 = jax.random.uniform(k4, (1, action_size), jnp.float32, -bound2, bound2)
    return w1, b1, w2, b2


if __name__ == "__main__":
    # CartPole-like sizes: obs=4, hidden=128, action=2; a batch of env steps
    # (amortizes launch cost; batch deliberately not a multiple of 8).
    obs_size, hidden_size, action_size = 4, 128, 2
    batch = 1000

    key = jax.random.PRNGKey(0)
    k_x, k_p = jax.random.split(key)
    x = jax.random.normal(k_x, (batch, obs_size), jnp.float32)
    w1, b1, w2, b2 = init_params(k_p, obs_size, hidden_size, action_size)

    # Packing runs once, outside the forward path.
    w1b, w2b, dims = pack_params(w1, b1, w2, b2)
    w1b, w2b = jax.block_until_ready((w1b, w2b))

    out = net_forward(x, w1b, w2b, dims)
    jax.block_until_ready(out)

    # reference check in plain JAX
    ref = jnp.maximum(x @ w1 + b1, 0.0) @ w2 + b2
    assert out.shape == (batch, action_size)
    assert jnp.allclose(out, ref, atol=1e-4, rtol=1e-4), float(jnp.abs(out - ref).max())

    print("KERNEL_OK")
</pallas_src>

<mosaic_0001>
module attributes {stable_mosaic.version = 11 : i64} {
  func.func @_mlp_kernel(%arg0: i32, %arg1: memref<1000x4xf32, #tpu.memory_space<vmem>>, %arg2: memref<8x128xf32, #tpu.memory_space<vmem>>, %arg3: memref<136x128xf32, #tpu.memory_space<vmem>>, %arg4: memref<1000x128xf32, #tpu.memory_space<vmem>>) attributes {dimension_semantics = [#tpu.dimension_semantics<parallel>], iteration_bounds = array<i64: 1>, scalar_prefetch = 0 : i64, scratch_operands = 0 : i64, tpu.core_type = #tpu.core_type<tc>, window_params = [{transform_indices = @transform_0, window_bounds = array<i64: 1000, 4>}, {pipeline_mode = #tpu.pipeline_mode<synchronous>, transform_indices = @transform_1, window_bounds = array<i64: 8, 128>}, {pipeline_mode = #tpu.pipeline_mode<synchronous>, transform_indices = @transform_2, window_bounds = array<i64: 136, 128>}, {transform_indices = @transform_3, window_bounds = array<i64: 1000, 128>}]} {
    %c0 = arith.constant 0 : index
    %c0_0 = arith.constant 0 : index
    %0 = vector.load %arg1[%c0, %c0_0] : memref<1000x4xf32, #tpu.memory_space<vmem>>, vector<1000x4xf32>
    %c0_1 = arith.constant 0 : index
    %c0_2 = arith.constant 0 : index
    %1 = vector.load %arg2[%c0_1, %c0_2] : memref<8x128xf32, #tpu.memory_space<vmem>>, vector<4x128xf32>
    %cst = arith.constant dense<0.000000e+00> : vector<1000x128xf32>
    %2 = tpu.matmul %0, %1, %cst {dimension_numbers = #tpu.dot_dimension_numbers<[1], [0], [0], [1], [0, 0, 1, 1], [], []>} : vector<1000x4xf32>, vector<4x128xf32>, vector<1000x128xf32> -> vector<1000x128xf32>
    %c4 = arith.constant 4 : index
    %c0_3 = arith.constant 0 : index
    %3 = vector.load %arg2[%c4, %c0_3] : memref<8x128xf32, #tpu.memory_space<vmem>>, vector<1x128xf32>
    %4 = vector.shape_cast %3 : vector<1x128xf32> to vector<128xf32>
    %5 = vector.shape_cast %4 : vector<128xf32> to vector<1x128xf32>
    %6 = vector.broadcast %5 : vector<1x128xf32> to vector<1000x128xf32>
    %7 = arith.addf %2, %6 : vector<1000x128xf32>
    %cst_4 = arith.constant 0.000000e+00 : f32
    %8 = vector.broadcast %cst_4 : f32 to vector<1000x128xf32>
    %9 = arith.maximumf %7, %8 : vector<1000x128xf32>
    %c0_5 = arith.constant 0 : index
    %c0_6 = arith.constant 0 : index
    %10 = vector.load %arg3[%c0_5, %c0_6] : memref<136x128xf32, #tpu.memory_space<vmem>>, vector<128x128xf32>
    %cst_7 = arith.constant dense<0.000000e+00> : vector<1000x128xf32>
    %11 = tpu.matmul %9, %10, %cst_7 {dimension_numbers = #tpu.dot_dimension_numbers<[1], [0], [0], [1], [0, 0, 1, 1], [], []>} : vector<1000x128xf32>, vector<128x128xf32>, vector<1000x128xf32> -> vector<1000x128xf32>
    %c128 = arith.constant 128 : index
    %c0_8 = arith.constant 0 : index
    %12 = vector.load %arg3[%c128, %c0_8] : memref<136x128xf32, #tpu.memory_space<vmem>>, vector<1x128xf32>
    %13 = vector.shape_cast %12 : vector<1x128xf32> to vector<128xf32>
    %14 = vector.shape_cast %13 : vector<128xf32> to vector<1x128xf32>
    %15 = vector.broadcast %14 : vector<1x128xf32> to vector<1000x128xf32>
    %16 = arith.addf %11, %15 : vector<1000x128xf32>
    %c0_9 = arith.constant 0 : index
    %c0_10 = arith.constant 0 : index
    %17 = vector.load %arg4[%c0_9, %c0_10] : memref<1000x128xf32, #tpu.memory_space<vmem>>, vector<1000x128xf32>
    tpu.vector_store %arg4[%c0_9, %c0_10], %16 {strides = array<i32>} : memref<1000x128xf32, #tpu.memory_space<vmem>>, vector<1000x128xf32>,
    return
  }
  func.func @transform_0(%arg0: i32) -> (i32, i32) {
    %c0_i32 = arith.constant 0 : i32
    %c0_i32_0 = arith.constant 0 : i32
    return %arg0, %c0_i32 : i32, i32
  }
  func.func @transform_1(%arg0: i32) -> (i32, i32) {
    %c0_i32 = arith.constant 0 : i32
    %c0_i32_0 = arith.constant 0 : i32
    %c0_i32_1 = arith.constant 0 : i32
    return %c0_i32, %c0_i32_0 : i32, i32
  }
  func.func @transform_2(%arg0: i32) -> (i32, i32) {
    %c0_i32 = arith.constant 0 : i32
    %c0_i32_0 = arith.constant 0 : i32
    %c0_i32_1 = arith.constant 0 : i32
    return %c0_i32, %c0_i32_0 : i32, i32
  }
  func.func @transform_3(%arg0: i32) -> (i32, i32) {
    %c0_i32 = arith.constant 0 : i32
    %c0_i32_0 = arith.constant 0 : i32
    return %arg0, %c0_i32 : i32, i32
  }
}

</mosaic_0001>

<llo_original>
// kernel: tpu_custom_call.1
$region0: #{tpu_custom_call.1}
  #allocation0 [shape = 'u32[]', space=smem, size = 0x4, offset = 0x4, fixed_abs, tag = 'smem constant byte address 0x4 - core index']
  #allocation1 [shape = 'u32[72,128]{1,0:T(1,128)}', space=vmem, size = 0x9000, scoped, tag = 'internal scratch']
  %s0 = inlined_call_operand.vmem [shape: f32[1000,4], index: 0, kind: input, shape index: {}]
  %s1 = inlined_call_operand.vmem [shape: f32[8,128], index: 1, kind: input, shape index: {}]
  %s2 = inlined_call_operand.vmem [shape: f32[136,128], index: 2, kind: input, shape index: {}]
  %s3 = inlined_call_operand.hbm [shape: f32[1000,128], index: 3, kind: output, shape index: {}]
  %s4 = sld [smem:[#allocation0]]
  $region22: #{tpu_custom_call.1} parent=0
    _
  %s6 = ssub.s32 1, %s4
  %s7 = scalar_select 0, %s6, %s4
  $region1: #{tpu_custom_call.1} parent=0
    #allocation2 [shape = 'u8[512000]{0}', space=vmem, size = 0x7d000, scoped, tag = 'output window, operand 0, single buffered']
    #allocation3 [shape = 's32[1]{0}', space=sflag, size = 0x4, scoped, tag = 'scoped memory for tpu_custom_call.1']
    %8 = vsyncpa [#allocation3], 0
    // Predicated region
    $region2: #{tpu_custom_call.1} parent=1 // pred_check
      _
    $region3: #{tpu_custom_call.1} parent=1 // pred_check_branch
      %10 = sbr.rel (0) target = $region5
    $region4: #{tpu_custom_call.1} parent=1 // pred_region
      _
    $region5: #{tpu_custom_call.1} parent=1 // pred_fallthru
      _
    // Predicated region
    $region6: #{tpu_custom_call.1} parent=1 // pred_check
      _
    $region7: #{tpu_custom_call.1} parent=1 // pred_check_branch
      %12 = sbr.rel (0) target = $region9
    $region8: #{tpu_custom_call.1} parent=1 // pred_region
      _
    $region9: #{tpu_custom_call.1} parent=1 // pred_fallthru
      _
    // Predicated region
    $region10: #{tpu_custom_call.1} parent=1 // pred_check
      _
    $region11: #{tpu_custom_call.1} parent=1 // pred_check_branch
      %14 = sbr.rel (0) target = $region13
    $region12: #{tpu_custom_call.1} parent=1 // pred_region
      _
    $region13: #{tpu_custom_call.1} parent=1 // pred_fallthru
      _
    %v15 = vld [vmem:[%s0] sm:$0xff]
    %v16 = vld [vmem:[%s0 + $0x8] sm:$0xff]
    %v17 = vld [vmem:[%s0 + $0x10] sm:$0xff]
    %v18 = vld [vmem:[%s0 + $0x18] sm:$0xff]
    %v19 = vld [vmem:[%s0 + $0x20] sm:$0xff]
    %v20 = vld [vmem:[%s0 + $0x28] sm:$0xff]
    %v21 = vld [vmem:[%s0 + $0x30] sm:$0xff]
    %v22 = vld [vmem:[%s0 + $0x38] sm:$0xff]
    %v23 = vld [vmem:[%s0 + $0x40] sm:$0xff]
    %v24 = vld [vmem:[%s0 + $0x48] sm:$0xff]
    %v25 = vld [vmem:[%s0 + $0x50] sm:$0xff]
    %v26 = vld [vmem:[%s0 + $0x58] sm:$0xff]
    %v27 = vld [vmem:[%s0 + $0x60] sm:$0xff]
    %v28 = vld [vmem:[%s0 + $0x68] sm:$0xff]
    %v29 = vld [vmem:[%s0 + $0x70] sm:$0xff]
    %v30 = vld [vmem:[%s0 + $0x78] sm:$0xff]
    %v31 = vld [vmem:[%s0 + $0x80] sm:$0xff]
    %v32 = vld [vmem:[%s0 + $0x88] sm:$0xff]
    %v33 = vld [vmem:[%s0 + $0x90] sm:$0xff]
    %v34 = vld [vmem:[%s0 + $0x98] sm:$0xff]
    %v35 = vld [vmem:[%s0 + $0xa0] sm:$0xff]
    %v36 = vld [vmem:[%s0 + $0xa8] sm:$0xff]
    %v37 = vld [vmem:[%s0 + $0xb0] sm:$0xff]
    %v38 = vld [vmem:[%s0 + $0xb8] sm:$0xff]
    %v39 = vld [vmem:[%s0 + $0xc0] sm:$0xff]
    %v40 = vld [vmem:[%s0 + $0xc8] sm:$0xff]
    %v41 = vld [vmem:[%s0 + $0xd0] sm:$0xff]
    %v42 = vld [vmem:[%s0 + $0xd8] sm:$0xff]
    %v43 = vld [vmem:[%s0 + $0xe0] sm:$0xff]
    %v44 = vld [vmem:[%s0 + $0xe8] sm:$0xff]
    %v45 = vld [vmem:[%s0 + $0xf0] sm:$0xff]
    %v46 = vld [vmem:[%s0 + $0xf8] sm:$0xff]
    %v47 = vld [vmem:[%s0 + $0x100] sm:$0xff]
    %v48 = vld [vmem:[%s0 + $0x108] sm:$0xff]
    %v49 = vld [vmem:[%s0 + $0x110] sm:$0xff]
    %v50 = vld [vmem:[%s0 + $0x118] sm:$0xff]
    %v51 = vld [vmem:[%s0 + $0x120] sm:$0xff]
    %v52 = vld [vmem:[%s0 + $0x128] sm:$0xff]
    %v53 = vld [vmem:[%s0 + $0x130] sm:$0xff]
    %v54 = vld [vmem:[%s0 + $0x138] sm:$0xff]
    %v55 = vld [vmem:[%s0 + $0x140] sm:$0xff]
    %v56 = vld [vmem:[%s0 + $0x148] sm:$0xff]
    %v57 = vld [vmem:[%s0 + $0x150] sm:$0xff]
    %v58 = vld [vmem:[%s0 + $0x158] sm:$0xff]
    %v59 = vld [vmem:[%s0 + $0x160] sm:$0xff]
    %v60 = vld [vmem:[%s0 + $0x168] sm:$0xff]
    %v61 = vld [vmem:[%s0 + $0x170] sm:$0xff]
    %v62 = vld [vmem:[%s0 + $0x178] sm:$0xff]
    %v63 = vld [vmem:[%s0 + $0x180] sm:$0xff]
    %v64 = vld [vmem:[%s0 + $0x188] sm:$0xff]
    %v65 = vld [vmem:[%s0 + $0x190] sm:$0xff]
    %v66 = vld [vmem:[%s0 + $0x198] sm:$0xff]
    %v67 = vld [vmem:[%s0 + $0x1a0] sm:$0xff]
    %v68 = vld [vmem:[%s0 + $0x1a8] sm:$0xff]
    %v69 = vld [vmem:[%s0 + $0x1b0] sm:$0xff]
    %v70 = vld [vmem:[%s0 + $0x1b8] sm:$0xff]
    %v71 = vld [vmem:[%s0 + $0x1c0] sm:$0xff]
    %v72 = vld [vmem:[%s0 + $0x1c8] sm:$0xff]
    %v73 = vld [vmem:[%s0 + $0x1d0] sm:$0xff]
    %v74 = vld [vmem:[%s0 + $0x1d8] sm:$0xff]
    %v75 = vld [vmem:[%s0 + $0x1e0] sm:$0xff]
    %v76 = vld [vmem:[%s0 + $0x1e8] sm:$0xff]
    %v77 = vld [vmem:[%s0 + $0x1f0] sm:$0xff]
    %v78 = vld [vmem:[%s0 + $0x1f8] sm:$0xff]
    %v79 = vld [vmem:[%s0 + $0x200] sm:$0xff]
    %v80 = vld [vmem:[%s0 + $0x208] sm:$0xff]
    %v81 = vld [vmem:[%s0 + $0x210] sm:$0xff]
    %v82 = vld [vmem:[%s0 + $0x218] sm:$0xff]
    %v83 = vld [vmem:[%s0 + $0x220] sm:$0xff]
    %v84 = vld [vmem:[%s0 + $0x228] sm:$0xff]
    %v85 = vld [vmem:[%s0 + $0x230] sm:$0xff]
    %v86 = vld [vmem:[%s0 + $0x238] sm:$0xff]
    %v87 = vld [vmem:[%s0 + $0x240] sm:$0xff]
    %v88 = vld [vmem:[%s0 + $0x248] sm:$0xff]
    %v89 = vld [vmem:[%s0 + $0x250] sm:$0xff]
    %v90 = vld [vmem:[%s0 + $0x258] sm:$0xff]
    %v91 = vld [vmem:[%s0 + $0x260] sm:$0xff]
    %v92 = vld [vmem:[%s0 + $0x268] sm:$0xff]
    %v93 = vld [vmem:[%s0 + $0x270] sm:$0xff]
    %v94 = vld [vmem:[%s0 + $0x278] sm:$0xff]
    %v95 = vld [vmem:[%s0 + $0x280] sm:$0xff]
    %v96 = vld [vmem:[%s0 + $0x288] sm:$0xff]
    %v97 = vld [vmem:[%s0 + $0x290] sm:$0xff]
    %v98 = vld [vmem:[%s0 + $0x298] sm:$0xff]
    %v99 = vld [vmem:[%s0 + $0x2a0] sm:$0xff]
    %v100 = vld [vmem:[%s0 + $0x2a8] sm:$0xff]
    %v101 = vld [vmem:[%s0 + $0x2b0] sm:$0xff]
    %v102 = vld [vmem:[%s0 + $0x2b8] sm:$0xff]
    %v103 = vld [vmem:[%s0 + $0x2c0] sm:$0xff]
    %v104 = vld [vmem:[%s0 + $0x2c8] sm:$0xff]
    %v105 = vld [vmem:[%s0 + $0x2d0] sm:$0xff]
    %v106 = vld [vmem:[%s0 + $0x2d8] sm:$0xff]
    %v107 = vld [vmem:[%s0 + $0x2e0] sm:$0xff]
    %v108 = vld [vmem:[%s0 + $0x2e8] sm:$0xff]
    %v109 = vld [vmem:[%s0 + $0x2f0] sm:$0xff]
    %v110 = vld [vmem:[%s0 + $0x2f8] sm:$0xff]
    %v111 = vld [vmem:[%s0 + $0x300] sm:$0xff]
    %v112 = vld [vmem:[%s0 + $0x308] sm:$0xff]
    %v113 = vld [vmem:[%s0 + $0x310] sm:$0xff]
    %v114 = vld [vmem:[%s0 + $0x318] sm:$0xff]
    %v115 = vld [vmem:[%s0 + $0x320] sm:$0xff]
    %v116 = vld [vmem:[%s0 + $0x328] sm:$0xff]
    %v117 = vld [vmem:[%s0 + $0x330] sm:$0xff]
    %v118 = vld [vmem:[%s0 + $0x338] sm:$0xff]
    %v119 = vld [vmem:[%s0 + $0x340] sm:$0xff]
    %v120 = vld [vmem:[%s0 + $0x348] sm:$0xff]
    %v121 = vld [vmem:[%s0 + $0x350] sm:$0xff]
    %v122 = vld [vmem:[%s0 + $0x358] sm:$0xff]
    %v123 = vld [vmem:[%s0 + $0x360] sm:$0xff]
    %v124 = vld [vmem:[%s0 + $0x368] sm:$0xff]
    %v125 = vld [vmem:[%s0 + $0x370] sm:$0xff]
    %v126 = vld [vmem:[%s0 + $0x378] sm:$0xff]
    %v127 = vld [vmem:[%s0 + $0x380] sm:$0xff]
    %v128 = vld [vmem:[%s0 + $0x388] sm:$0xff]
    %v129 = vld [vmem:[%s0 + $0x390] sm:$0xff]
    %v130 = vld [vmem:[%s0 + $0x398] sm:$0xff]
    %v131 = vld [vmem:[%s0 + $0x3a0] sm:$0xff]
    %v132 = vld [vmem:[%s0 + $0x3a8] sm:$0xff]
    %v133 = vld [vmem:[%s0 + $0x3b0] sm:$0xff]
    %v134 = vld [vmem:[%s0 + $0x3b8] sm:$0xff]
    %v135 = vld [vmem:[%s0 + $0x3c0] sm:$0xff]
    %v136 = vld [vmem:[%s0 + $0x3c8] sm:$0xff]
    %v137 = vld [vmem:[%s0 + $0x3d0] sm:$0xff]
    %v138 = vld [vmem:[%s0 + $0x3d8] sm:$0xff]
    %v139 = vld [vmem:[%s0 + $0x3e0] sm:$0xff]
    %v140 = vld [vmem:[%s1] sm:$0xf]
    %v141 = vld [vmem:[%s1 + $0x4] sm:$0x1]
    %v142 = vperm.slane %v141, 0
    %vm143 = vcmask 31744
    %v145 = vsel %vm143, %v15, 0
    %v148 = vsel %vm143, %v16, 0
    %v151 = vsel %vm143, %v17, 0
    %v154 = vsel %vm143, %v18, 0
    %v157 = vsel %vm143, %v19, 0
    %v160 = vsel %vm143, %v20, 0
    %v163 = vsel %vm143, %v21, 0
    %v166 = vsel %vm143, %v22, 0
    %v169 = vsel %vm143, %v23, 0
    %v172 = vsel %vm143, %v24, 0
    %v175 = vsel %vm143, %v25, 0
    %v178 = vsel %vm143, %v26, 0
    %v181 = vsel %vm143, %v27, 0
    %v184 = vsel %vm143, %v28, 0
    %v187 = vsel %vm143, %v29, 0
    %v190 = vsel %vm143, %v30, 0
    %v193 = vsel %vm143, %v31, 0
    %v196 = vsel %vm143, %v32, 0
    %v199 = vsel %vm143, %v33, 0
    %v202 = vsel %vm143, %v34, 0
    %v205 = vsel %vm143, %v35, 0
    %v208 = vsel %vm143, %v36, 0
    %v211 = vsel %vm143, %v37, 0
    %v214 = vsel %vm143, %v38, 0
    %v217 = vsel %vm143, %v39, 0
    %v220 = vsel %vm143, %v40, 0
    %v223 = vsel %vm143, %v41, 0
    %v226 = vsel %vm143, %v42, 0
    %v229 = vsel %vm143, %v43, 0
    %v232 = vsel %vm143, %v44, 0
    %v235 = vsel %vm143, %v45, 0
    %v238 = vsel %vm143, %v46, 0
    %v241 = vsel %vm143, %v47, 0
    %v244 = vsel %vm143, %v48, 0
    %v247 = vsel %vm143, %v49, 0
    %v250 = vsel %vm143, %v50, 0
    %v253 = vsel %vm143, %v51, 0
    %v256 = vsel %vm143, %v52, 0
    %v259 = vsel %vm143, %v53, 0
    %v262 = vsel %vm143, %v54, 0
    %v265 = vsel %vm143, %v55, 0
    %v268 = vsel %vm143, %v56, 0
    %v271 = vsel %vm143, %v57, 0
    %v274 = vsel %vm143, %v58, 0
    %v277 = vsel %vm143, %v59, 0
    %v280 = vsel %vm143, %v60, 0
    %v283 = vsel %vm143, %v61, 0
    %v286 = vsel %vm143, %v62, 0
    %v289 = vsel %vm143, %v63, 0
    %v292 = vsel %vm143, %v64, 0
    %v295 = vsel %vm143, %v65, 0
    %v298 = vsel %vm143, %v66, 0
    %v301 = vsel %vm143, %v67, 0
    %v304 = vsel %vm143, %v68, 0
    %v307 = vsel %vm143, %v69, 0
    %v310 = vsel %vm143, %v70, 0
    %v313 = vsel %vm143, %v71, 0
    %v316 = vsel %vm143, %v72, 0
    %v319 = vsel %vm143, %v73, 0
    %v322 = vsel %vm143, %v74, 0
    %v325 = vsel %vm143, %v75, 0
    %v328 = vsel %vm143, %v76, 0
    %v331 = vsel %vm143, %v77, 0
    %v334 = vsel %vm143, %v78, 0
    %v337 = vsel %vm143, %v79, 0
    %v340 = vsel %vm143, %v80, 0
    %v343 = vsel %vm143, %v81, 0
    %v346 = vsel %vm143, %v82, 0
    %v349 = vsel %vm143, %v83, 0
    %v352 = vsel %vm143, %v84, 0
    %v355 = vsel %vm143, %v85, 0
    %v358 = vsel %vm143, %v86, 0
    %v361 = vsel %vm143, %v87, 0
    %v364 = vsel %vm143, %v88, 0
    %v367 = vsel %vm143, %v89, 0
    %v370 = vsel %vm143, %v90, 0
    %v373 = vsel %vm143, %v91, 0
    %v376 = vsel %vm143, %v92, 0
    %v379 = vsel %vm143, %v93, 0
    %v382 = vsel %vm143, %v94, 0
    %v385 = vsel %vm143, %v95, 0
    %v388 = vsel %vm143, %v96, 0
    %v391 = vsel %vm143, %v97, 0
    %v394 = vsel %vm143, %v98, 0
    %v397 = vsel %vm143, %v99, 0
    %v400 = vsel %vm143, %v100, 0
    %v403 = vsel %vm143, %v101, 0
    %v406 = vsel %vm143, %v102, 0
    %v409 = vsel %vm143, %v103, 0
    %v412 = vsel %vm143, %v104, 0
    %v415 = vsel %vm143, %v105, 0
    %v418 = vsel %vm143, %v106, 0
    %v421 = vsel %vm143, %v107, 0
    %v424 = vsel %vm143, %v108, 0
    %v427 = vsel %vm143, %v109, 0
    %v430 = vsel %vm143, %v110, 0
    %v433 = vsel %vm143, %v111, 0
    %v436 = vsel %vm143, %v112, 0
    %v439 = vsel %vm143, %v113, 0
    %v442 = vsel %vm143, %v114, 0
    %v445 = vsel %vm143, %v115, 0
    %v448 = vsel %vm143, %v116, 0
    %v451 = vsel %vm143, %v117, 0
    %v454 = vsel %vm143, %v118, 0
    %v457 = vsel %vm143, %v119, 0
    %v460 = vsel %vm143, %v120, 0
    %v463 = vsel %vm143, %v121, 0
    %v466 = vsel %vm143, %v122, 0
    %v469 = vsel %vm143, %v123, 0
    %v472 = vsel %vm143, %v124, 0
    %v475 = vsel %vm143, %v125, 0
    %v478 = vsel %vm143, %v126, 0
    %v481 = vsel %vm143, %v127, 0
    %v484 = vsel %vm143, %v128, 0
    %v487 = vsel %vm143, %v129, 0
    %v490 = vsel %vm143, %v130, 0
    %v493 = vsel %vm143, %v131, 0
    %v496 = vsel %vm143, %v132, 0
    %v499 = vsel %vm143, %v133, 0
    %v502 = vsel %vm143, %v134, 0
    %v505 = vsel %vm143, %v135, 0
    %v508 = vsel %vm143, %v136, 0
    %v511 = vsel %vm143, %v137, 0
    %v514 = vsel %vm143, %v138, 0
    %v517 = vsel %vm143, %v139, 0
    %vm519 = vcmask 1043456
    %v521 = vsel %vm519, %v140, 0
    %523 = vmatpush.msra.mxu0 0.0
    %524 = vmatpush.msra.mxu0 0.0
    %525 = vmatpush.msra.mxu0 0.0
    %526 = vmatpush.msra.mxu0 0.0
    %527 = vmatpush.msra.mxu0 0.0
    %528 = vmatpush.msra.mxu0 0.0
    %529 = vmatpush.msra.mxu0 0.0
    %530 = vmatpush.msra.mxu0 0.0
    %531 = vmatpush.msra.mxu0 0.0
    %532 = vmatpush.msra.mxu0 0.0
    %533 = vmatpush.msra.mxu0 0.0
    %534 = vmatpush.msra.mxu0 0.0
    %535 = vmatpush.msra.mxu0 0.0
    %536 = vmatpush.msra.mxu0 0.0
    %537 = vmatpush.msra.mxu0 0.0
    %538 = vmatpush.msra.mxu0 %v521
    %539 = vmatmul.f32.gmra.mxu0 %v145
    %v540 = vpop.f32.mrf.mxu0
    %v541 = vadd.f32 %v142, %v540
    %542 = vmatmul.f32.gmra.mxu0 %v148
    %v543 = vpop.f32.mrf.mxu0
    %v544 = vadd.f32 %v142, %v543
    %545 = vmatmul.f32.gmra.mxu0 %v151
    %v546 = vpop.f32.mrf.mxu0
    %v547 = vadd.f32 %v142, %v546
    %548 = vmatmul.f32.gmra.mxu0 %v154
    %v549 = vpop.f32.mrf.mxu0
    %v550 = vadd.f32 %v142, %v549
    %551 = vmatmul.f32.gmra.mxu0 %v157
    %v552 = vpop.f32.mrf.mxu0
    %v553 = vadd.f32 %v142, %v552
    %554 = vmatmul.f32.gmra.mxu0 %v160
    %v555 = vpop.f32.mrf.mxu0
    %v556 = vadd.f32 %v142, %v555
    %557 = vmatmul.f32.gmra.mxu0 %v163
    %v558 = vpop.f32.mrf.mxu0
    %v559 = vadd.f32 %v142, %v558
    %560 = vmatmul.f32.gmra.mxu0 %v166
    %v561 = vpop.f32.mrf.mxu0
    %v562 = vadd.f32 %v142, %v561
    %563 = vmatmul.f32.gmra.mxu0 %v169
    %v564 = vpop.f32.mrf.mxu0
    %v565 = vadd.f32 %v142, %v564
    %566 = vmatmul.f32.gmra.mxu0 %v172
    %v567 = vpop.f32.mrf.mxu0
    %v568 = vadd.f32 %v142, %v567
    %569 = vmatmul.f32.gmra.mxu0 %v175
    %v570 = vpop.f32.mrf.mxu0
    %v571 = vadd.f32 %v142, %v570
    %572 = vmatmul.f32.gmra.mxu0 %v178
    %v573 = vpop.f32.mrf.mxu0
    %v574 = vadd.f32 %v142, %v573
    %575 = vmatmul.f32.gmra.mxu0 %v181
    %v576 = vpop.f32.mrf.mxu0
    %v577 = vadd.f32 %v142, %v576
    %578 = vmatmul.f32.gmra.mxu0 %v184
    %v579 = vpop.f32.mrf.mxu0
    %v580 = vadd.f32 %v142, %v579
    %581 = vmatmul.f32.gmra.mxu0 %v187
    %v582 = vpop.f32.mrf.mxu0
    %v583 = vadd.f32 %v142, %v582
    %584 = vmatmul.f32.gmra.mxu0 %v190
    %v585 = vpop.f32.mrf.mxu0
    %v586 = vadd.f32 %v142, %v585
    %587 = vmatmul.f32.gmra.mxu0 %v193
    %v588 = vpop.f32.mrf.mxu0
    %v589 = vadd.f32 %v142, %v588
    %590 = vmatmul.f32.gmra.mxu0 %v196
    %v591 = vpop.f32.mrf.mxu0
    %v592 = vadd.f32 %v142, %v591
    %593 = vmatmul.f32.gmra.mxu0 %v199
    %v594 = vpop.f32.mrf.mxu0
    %v595 = vadd.f32 %v142, %v594
    %596 = vmatmul.f32.gmra.mxu0 %v202
    %v597 = vpop.f32.mrf.mxu0
    %v598 = vadd.f32 %v142, %v597
    %599 = vmatmul.f32.gmra.mxu0 %v205
    %v600 = vpop.f32.mrf.mxu0
    %v601 = vadd.f32 %v142, %v600
    %602 = vmatmul.f32.gmra.mxu0 %v208
    %v603 = vpop.f32.mrf.mxu0
    %v604 = vadd.f32 %v142, %v603
    %605 = vmatmul.f32.gmra.mxu0 %v211
    %v606 = vpop.f32.mrf.mxu0
    %v607 = vadd.f32 %v142, %v606
    %608 = vmatmul.f32.gmra.mxu0 %v214
    %v609 = vpop.f32.mrf.mxu0
    %v610 = vadd.f32 %v142, %v609
    %611 = vmatmul.f32.gmra.mxu0 %v217
    %v612 = vpop.f32.mrf.mxu0
    %v613 = vadd.f32 %v142, %v612
    %614 = vmatmul.f32.gmra.mxu0 %v220
    %v615 = vpop.f32.mrf.mxu0
    %v616 = vadd.f32 %v142, %v615
    %617 = vmatmul.f32.gmra.mxu0 %v223
    %v618 = vpop.f32.mrf.mxu0
    %v619 = vadd.f32 %v142, %v618
    %620 = vmatmul.f32.gmra.mxu0 %v226
    %v621 = vpop.f32.mrf.mxu0
    %v622 = vadd.f32 %v142, %v621
    %623 = vmatmul.f32.gmra.mxu0 %v229
    %v624 = vpop.f32.mrf.mxu0
    %v625 = vadd.f32 %v142, %v624
    %626 = vmatmul.f32.gmra.mxu0 %v232
    %v627 = vpop.f32.mrf.mxu0
    %v628 = vadd.f32 %v142, %v627
    %629 = vmatmul.f32.gmra.mxu0 %v235
    %v630 = vpop.f32.mrf.mxu0
    %v631 = vadd.f32 %v142, %v630
    %632 = vmatmul.f32.gmra.mxu0 %v238
    %v633 = vpop.f32.mrf.mxu0
    %v634 = vadd.f32 %v142, %v633
    %635 = vmatmul.f32.gmra.mxu0 %v241
    %v636 = vpop.f32.mrf.mxu0
    %v637 = vadd.f32 %v142, %v636
    %638 = vmatmul.f32.gmra.mxu0 %v244
    %v639 = vpop.f32.mrf.mxu0
    %v640 = vadd.f32 %v142, %v639
    %641 = vmatmul.f32.gmra.mxu0 %v247
    %v642 = vpop.f32.mrf.mxu0
    %v643 = vadd.f32 %v142, %v642
    %644 = vmatmul.f32.gmra.mxu0 %v250
    %v645 = vpop.f32.mrf.mxu0
    %v646 = vadd.f32 %v142, %v645
    %647 = vmatmul.f32.gmra.mxu0 %v253
    %v648 = vpop.f32.mrf.mxu0
    %v649 = vadd.f32 %v142, %v648
    %650 = vmatmul.f32.gmra.mxu0 %v256
    %v651 = vpop.f32.mrf.mxu0
    %v652 = vadd.f32 %v142, %v651
    %653 = vmatmul.f32.gmra.mxu0 %v259
    %v654 = vpop.f32.mrf.mxu0
    %v655 = vadd.f32 %v142, %v654
    %656 = vmatmul.f32.gmra.mxu0 %v262
    %v657 = vpop.f32.mrf.mxu0
    %v658 = vadd.f32 %v142, %v657
    %659 = vmatmul.f32.gmra.mxu0 %v265
    %v660 = vpop.f32.mrf.mxu0
    %v661 = vadd.f32 %v142, %v660
    %662 = vmatmul.f32.gmra.mxu0 %v268
    %v663 = vpop.f32.mrf.mxu0
    %v664 = vadd.f32 %v142, %v663
    %665 = vmatmul.f32.gmra.mxu0 %v271
    %v666 = vpop.f32.mrf.mxu0
    %v667 = vadd.f32 %v142, %v666
    %668 = vmatmul.f32.gmra.mxu0 %v274
    %v669 = vpop.f32.mrf.mxu0
    %v670 = vadd.f32 %v142, %v669
    %671 = vmatmul.f32.gmra.mxu0 %v277
    %v672 = vpop.f32.mrf.mxu0
    %v673 = vadd.f32 %v142, %v672
    %674 = vmatmul.f32.gmra.mxu0 %v280
    %v675 = vpop.f32.mrf.mxu0
    %v676 = vadd.f32 %v142, %v675
    %677 = vmatmul.f32.gmra.mxu0 %v283
    %v678 = vpop.f32.mrf.mxu0
    %v679 = vadd.f32 %v142, %v678
    %680 = vmatmul.f32.gmra.mxu0 %v286
    %v681 = vpop.f32.mrf.mxu0
    %v682 = vadd.f32 %v142, %v681
    %683 = vmatmul.f32.gmra.mxu0 %v289
    %v684 = vpop.f32.mrf.mxu0
    %v685 = vadd.f32 %v142, %v684
    %686 = vmatmul.f32.gmra.mxu0 %v292
    %v687 = vpop.f32.mrf.mxu0
    %v688 = vadd.f32 %v142, %v687
    %689 = vmatmul.f32.gmra.mxu0 %v295
    %v690 = vpop.f32.mrf.mxu0
    %v691 = vadd.f32 %v142, %v690
    %692 = vmatmul.f32.gmra.mxu0 %v298
    %v693 = vpop.f32.mrf.mxu0
    %v694 = vadd.f32 %v142, %v693
    %695 = vmatmul.f32.gmra.mxu0 %v301
    %v696 = vpop.f32.mrf.mxu0
    %v697 = vadd.f32 %v142, %v696
    %698 = vmatmul.f32.gmra.mxu0 %v304
    %v699 = vpop.f32.mrf.mxu0
    %v700 = vadd.f32 %v142, %v699
    %701 = vmatmul.f32.gmra.mxu0 %v307
    %v702 = vpop.f32.mrf.mxu0
    %v703 = vadd.f32 %v142, %v702
    %704 = vmatmul.f32.gmra.mxu0 %v310
    %v705 = vpop.f32.mrf.mxu0
    %v706 = vadd.f32 %v142, %v705
    %707 = vmatmul.f32.gmra.mxu0 %v313
    %v708 = vpop.f32.mrf.mxu0
    %v709 = vadd.f32 %v142, %v708
    %710 = vmatmul.f32.gmra.mxu0 %v316
    %v711 = vpop.f32.mrf.mxu0
    %v712 = vadd.f32 %v142, %v711
    %713 = vmatmul.f32.gmra.mxu0 %v319
    %v714 = vpop.f32.mrf.mxu0
    %v715 = vadd.f32 %v142, %v714
    %716 = vmatmul.f32.gmra.mxu0 %v322
    %v717 = vpop.f32.mrf.mxu0
    %v718 = vadd.f32 %v142, %v717
    %719 = vmatmul.f32.gmra.mxu0 %v325
    %v720 = vpop.f32.mrf.mxu0
    %v721 = vadd.f32 %v142, %v720
    %722 = vmatmul.f32.gmra.mxu0 %v328
    %v723 = vpop.f32.mrf.mxu0
    %v724 = vadd.f32 %v142, %v723
    %725 = vmatmul.f32.gmra.mxu0 %v331
    %v726 = vpop.f32.mrf.mxu0
    %v727 = vadd.f32 %v142, %v726
    %728 = vmatmul.f32.gmra.mxu0 %v334
    %v729 = vpop.f32.mrf.mxu0
    %v730 = vadd.f32 %v142, %v729
    %731 = vmatmul.f32.gmra.mxu0 %v337
    %v732 = vpop.f32.mrf.mxu0
    %v733 = vadd.f32 %v142, %v732
    %734 = vmatmul.f32.gmra.mxu0 %v340
    %v735 = vpop.f32.mrf.mxu0
    %v736 = vadd.f32 %v142, %v735
    %737 = vmatmul.f32.gmra.mxu0 %v343
    %v738 = vpop.f32.mrf.mxu0
    %v739 = vadd.f32 %v142, %v738
    %740 = vmatmul.f32.gmra.mxu0 %v346
    %v741 = vpop.f32.mrf.mxu0
    %v742 = vadd.f32 %v142, %v741
    %743 = vmatmul.f32.gmra.mxu0 %v349
    %v744 = vpop.f32.mrf.mxu0
    %v745 = vadd.f32 %v142, %v744
    %746 = vmatmul.f32.gmra.mxu0 %v352
    %v747 = vpop.f32.mrf.mxu0
    %v748 = vadd.f32 %v142, %v747
    %749 = vmatmul.f32.gmra.mxu0 %v355
    %v750 = vpop.f32.mrf.mxu0
    %v751 = vadd.f32 %v142, %v750
    %752 = vmatmul.f32.gmra.mxu0 %v358
    %v753 = vpop.f32.mrf.mxu0
    %v754 = vadd.f32 %v142, %v753
    %755 = vmatmul.f32.gmra.mxu0 %v361
    %v756 = vpop.f32.mrf.mxu0
    %v757 = vadd.f32 %v142, %v756
    %758 = vmatmul.f32.gmra.mxu0 %v364
    %v759 = vpop.f32.mrf.mxu0
    %v760 = vadd.f32 %v142, %v759
    %761 = vmatmul.f32.gmra.mxu0 %v367
    %v762 = vpop.f32.mrf.mxu0
    %v763 = vadd.f32 %v142, %v762
    %764 = vmatmul.f32.gmra.mxu0 %v370
    %v765 = vpop.f32.mrf.mxu0
    %v766 = vadd.f32 %v142, %v765
    %767 = vmatmul.f32.gmra.mxu0 %v373
    %v768 = vpop.f32.mrf.mxu0
    %v769 = vadd.f32 %v142, %v768
    %770 = vmatmul.f32.gmra.mxu0 %v376
    %v771 = vpop.f32.mrf.mxu0
    %v772 = vadd.f32 %v142, %v771
    %773 = vmatmul.f32.gmra.mxu0 %v379
    %v774 = vpop.f32.mrf.mxu0
    %v775 = vadd.f32 %v142, %v774
    %776 = vmatmul.f32.gmra.mxu0 %v382
    %v777 = vpop.f32.mrf.mxu0
    %v778 = vadd.f32 %v142, %v777
    %779 = vmatmul.f32.gmra.mxu0 %v385
    %v780 = vpop.f32.mrf.mxu0
    %v781 = vadd.f32 %v142, %v780
    %782 = vmatmul.f32.gmra.mxu0 %v388
    %v783 = vpop.f32.mrf.mxu0
    %v784 = vadd.f32 %v142, %v783
    %785 = vmatmul.f32.gmra.mxu0 %v391
    %v786 = vpop.f32.mrf.mxu0
    %v787 = vadd.f32 %v142, %v786
    %788 = vmatmul.f32.gmra.mxu0 %v394
    %v789 = vpop.f32.mrf.mxu0
    %v790 = vadd.f32 %v142, %v789
    %791 = vmatmul.f32.gmra.mxu0 %v397
    %v792 = vpop.f32.mrf.mxu0
    %v793 = vadd.f32 %v142, %v792
    %794 = vmatmul.f32.gmra.mxu0 %v400
    %v795 = vpop.f32.mrf.mxu0
    %v796 = vadd.f32 %v142, %v795
    %797 = vmatmul.f32.gmra.mxu0 %v403
    %v798 = vpop.f32.mrf.mxu0
    %v799 = vadd.f32 %v142, %v798
    %800 = vmatmul.f32.gmra.mxu0 %v406
    %v801 = vpop.f32.mrf.mxu0
    %v802 = vadd.f32 %v142, %v801
    %803 = vmatmul.f32.gmra.mxu0 %v409
    %v804 = vpop.f32.mrf.mxu0
    %v805 = vadd.f32 %v142, %v804
    %806 = vmatmul.f32.gmra.mxu0 %v412
    %v807 = vpop.f32.mrf.mxu0
    %v808 = vadd.f32 %v142, %v807
    %809 = vmatmul.f32.gmra.mxu0 %v415
    %v810 = vpop.f32.mrf.mxu0
    %v811 = vadd.f32 %v142, %v810
    %812 = vmatmul.f32.gmra.mxu0 %v418
    %v813 = vpop.f32.mrf.mxu0
    %v814 = vadd.f32 %v142, %v813
    %815 = vmatmul.f32.gmra.mxu0 %v421
    %v816 = vpop.f32.mrf.mxu0
    %v817 = vadd.f32 %v142, %v816
    %818 = vmatmul.f32.gmra.mxu0 %v424
    %v819 = vpop.f32.mrf.mxu0
    %v820 = vadd.f32 %v142, %v819
    %821 = vmatmul.f32.gmra.mxu0 %v427
    %v822 = vpop.f32.mrf.mxu0
    %v823 = vadd.f32 %v142, %v822
    %824 = vmatmul.f32.gmra.mxu0 %v430
    %v825 = vpop.f32.mrf.mxu0
    %v826 = vadd.f32 %v142, %v825
    %827 = vmatmul.f32.gmra.mxu0 %v433
    %v828 = vpop.f32.mrf.mxu0
    %v829 = vadd.f32 %v142, %v828
    %830 = vmatmul.f32.gmra.mxu0 %v436
    %v831 = vpop.f32.mrf.mxu0
    %v832 = vadd.f32 %v142, %v831
    %833 = vmatmul.f32.gmra.mxu0 %v439
    %v834 = vpop.f32.mrf.mxu0
    %v835 = vadd.f32 %v142, %v834
    %836 = vmatmul.f32.gmra.mxu0 %v442
    %v837 = vpop.f32.mrf.mxu0
    %v838 = vadd.f32 %v142, %v837
    %839 = vmatmul.f32.gmra.mxu0 %v445
    %v840 = vpop.f32.mrf.mxu0
    %v841 = vadd.f32 %v142, %v840
    %842 = vmatmul.f32.gmra.mxu0 %v448
    %v843 = vpop.f32.mrf.mxu0
    %v844 = vadd.f32 %v142, %v843
    %845 = vmatmul.f32.gmra.mxu0 %v451
    %v846 = vpop.f32.mrf.mxu0
    %v847 = vadd.f32 %v142, %v846
    %848 = vmatmul.f32.gmra.mxu0 %v454
    %v849 = vpop.f32.mrf.mxu0
    %v850 = vadd.f32 %v142, %v849
    %851 = vmatmul.f32.gmra.mxu0 %v457
    %v852 = vpop.f32.mrf.mxu0
    %v853 = vadd.f32 %v142, %v852
    %854 = vmatmul.f32.gmra.mxu0 %v460
    %v855 = vpop.f32.mrf.mxu0
    %v856 = vadd.f32 %v142, %v855
    %857 = vmatmul.f32.gmra.mxu0 %v463
    %v858 = vpop.f32.mrf.mxu0
    %v859 = vadd.f32 %v142, %v858
    %860 = vmatmul.f32.gmra.mxu0 %v466
    %v861 = vpop.f32.mrf.mxu0
    %v862 = vadd.f32 %v142, %v861
    %863 = vmatmul.f32.gmra.mxu0 %v469
    %v864 = vpop.f32.mrf.mxu0
    %v865 = vadd.f32 %v142, %v864
    %866 = vmatmul.f32.gmra.mxu0 %v472
    %v867 = vpop.f32.mrf.mxu0
    %v868 = vadd.f32 %v142, %v867
    %869 = vmatmul.f32.gmra.mxu0 %v475
    %v870 = vpop.f32.mrf.mxu0
    %v871 = vadd.f32 %v142, %v870
    %872 = vmatmul.f32.gmra.mxu0 %v478
    %v873 = vpop.f32.mrf.mxu0
    %v874 = vadd.f32 %v142, %v873
    %875 = vmatmul.f32.gmra.mxu0 %v481
    %v876 = vpop.f32.mrf.mxu0
    %v877 = vadd.f32 %v142, %v876
    %878 = vmatmul.f32.gmra.mxu0 %v484
    %v879 = vpop.f32.mrf.mxu0
    %v880 = vadd.f32 %v142, %v879
    %881 = vmatmul.f32.gmra.mxu0 %v487
    %v882 = vpop.f32.mrf.mxu0
    %v883 = vadd.f32 %v142, %v882
    %884 = vmatmul.f32.gmra.mxu0 %v490
    %v885 = vpop.f32.mrf.mxu0
    %v886 = vadd.f32 %v142, %v885
    %887 = vmatmul.f32.gmra.mxu0 %v493
    %v888 = vpop.f32.mrf.mxu0
    %v889 = vadd.f32 %v142, %v888
    %890 = vmatmul.f32.gmra.mxu0 %v496
    %v891 = vpop.f32.mrf.mxu0
    %v892 = vadd.f32 %v142, %v891
    %893 = vmatmul.f32.gmra.mxu0 %v499
    %v894 = vpop.f32.mrf.mxu0
    %v895 = vadd.f32 %v142, %v894
    %896 = vmatmul.f32.gmra.mxu0 %v502
    %v897 = vpop.f32.mrf.mxu0
    %v898 = vadd.f32 %v142, %v897
    %899 = vmatmul.f32.gmra.mxu0 %v505
    %v900 = vpop.f32.mrf.mxu0
    %v901 = vadd.f32 %v142, %v900
    %902 = vmatmul.f32.gmra.mxu0 %v508
    %v903 = vpop.f32.mrf.mxu0
    %v904 = vadd.f32 %v142, %v903
    %905 = vmatmul.f32.gmra.mxu0 %v511
    %v906 = vpop.f32.mrf.mxu0
    %v907 = vadd.f32 %v142, %v906
    %908 = vmatmul.f32.gmra.mxu0 %v514
    %v909 = vpop.f32.mrf.mxu0
    %v910 = vadd.f32 %v142, %v909
    %911 = vmatmul.f32.gmra.mxu0 %v517
    %v912 = vpop.f32.mrf.mxu0
    %v913 = vadd.f32 %v142, %v912
    %914 = vdwg.mxu0
    %v915 = vmax.f32 %v541, 0.0
    %v916 = vmax.f32 %v544, 0.0
    %v917 = vmax.f32 %v547, 0.0
    %v918 = vmax.f32 %v550, 0.0
    %v919 = vmax.f32 %v553, 0.0
    %v920 = vmax.f32 %v556, 0.0
    %v921 = vmax.f32 %v559, 0.0
    %v922 = vmax.f32 %v562, 0.0
    %v923 = vmax.f32 %v565, 0.0
    %v924 = vmax.f32 %v568, 0.0
    %v925 = vmax.f32 %v571, 0.0
    %v926 = vmax.f32 %v574, 0.0
    %v927 = vmax.f32 %v577, 0.0
    %v928 = vmax.f32 %v580, 0.0
    %v929 = vmax.f32 %v583, 0.0
    %v930 = vmax.f32 %v586, 0.0
    %v931 = vmax.f32 %v589, 0.0
    %v932 = vmax.f32 %v592, 0.0
    %v933 = vmax.f32 %v595, 0.0
    %v934 = vmax.f32 %v598, 0.0
    %v935 = vmax.f32 %v601, 0.0
    %v936 = vmax.f32 %v604, 0.0
    %v937 = vmax.f32 %v607, 0.0
    %v938 = vmax.f32 %v610, 0.0
    %v939 = vmax.f32 %v613, 0.0
    %v940 = vmax.f32 %v616, 0.0
    %v941 = vmax.f32 %v619, 0.0
    %v942 = vmax.f32 %v622, 0.0
    %v943 = vmax.f32 %v625, 0.0
    %v944 = vmax.f32 %v628, 0.0
    %v945 = vmax.f32 %v631, 0.0
    %v946 = vmax.f32 %v634, 0.0
    %v947 = vmax.f32 %v637, 0.0
    %v948 = vmax.f32 %v640, 0.0
    %v949 = vmax.f32 %v643, 0.0
    %v950 = vmax.f32 %v646, 0.0
    %v951 = vmax.f32 %v649, 0.0
    %v952 = vmax.f32 %v652, 0.0
    %v953 = vmax.f32 %v655, 0.0
    %v954 = vmax.f32 %v658, 0.0
    %v955 = vmax.f32 %v661, 0.0
    %v956 = vmax.f32 %v664, 0.0
    %v957 = vmax.f32 %v667, 0.0
    %v958 = vmax.f32 %v670, 0.0
    %v959 = vmax.f32 %v673, 0.0
    %v960 = vmax.f32 %v676, 0.0
    %v961 = vmax.f32 %v679, 0.0
    %v962 = vmax.f32 %v682, 0.0
    %v963 = vmax.f32 %v685, 0.0
    %v964 = vmax.f32 %v688, 0.0
    %v965 = vmax.f32 %v691, 0.0
    %v966 = vmax.f32 %v694, 0.0
    %v967 = vmax.f32 %v697, 0.0
    %v968 = vmax.f32 %v700, 0.0
    %v969 = vmax.f32 %v703, 0.0
    %v970 = vmax.f32 %v706, 0.0
    %v971 = vmax.f32 %v709, 0.0
    %v972 = vmax.f32 %v712, 0.0
    %v973 = vmax.f32 %v715, 0.0
    %v974 = vmax.f32 %v718, 0.0
    %v975 = vmax.f32 %v721, 0.0
    %v976 = vmax.f32 %v724, 0.0
    %v977 = vmax.f32 %v727, 0.0
    %v978 = vmax.f32 %v730, 0.0
    %v979 = vmax.f32 %v733, 0.0
    %v980 = vmax.f32 %v736, 0.0
    %v981 = vmax.f32 %v739, 0.0
    %v982 = vmax.f32 %v742, 0.0
    %v983 = vmax.f32 %v745, 0.0
    %v984 = vmax.f32 %v748, 0.0
    %v985 = vmax.f32 %v751, 0.0
    %v986 = vmax.f32 %v754, 0.0
    %v987 = vmax.f32 %v757, 0.0
    %v988 = vmax.f32 %v760, 0.0
    %v989 = vmax.f32 %v763, 0.0
    %v990 = vmax.f32 %v766, 0.0
    %v991 = vmax.f32 %v769, 0.0
    %v992 = vmax.f32 %v772, 0.0
    %v993 = vmax.f32 %v775, 0.0
    %v994 = vmax.f32 %v778, 0.0
    %v995 = vmax.f32 %v781, 0.0
    %v996 = vmax.f32 %v784, 0.0
    %v997 = vmax.f32 %v787, 0.0
    %v998 = vmax.f32 %v790, 0.0
    %v999 = vmax.f32 %v793, 0.0
    %v1000 = vmax.f32 %v796, 0.0
    %v1001 = vmax.f32 %v799, 0.0
    %v1002 = vmax.f32 %v802, 0.0
    %v1003 = vmax.f32 %v805, 0.0
    %v1004 = vmax.f32 %v808, 0.0
    %v1005 = vmax.f32 %v811, 0.0
    %v1006 = vmax.f32 %v814, 0.0
    %v1007 = vmax.f32 %v817, 0.0
    %v1008 = vmax.f32 %v820, 0.0
    %v1009 = vmax.f32 %v823, 0.0
    %v1010 = vmax.f32 %v826, 0.0
    %v1011 = vmax.f32 %v829, 0.0
    %v1012 = vmax.f32 %v832, 0.0
    %v1013 = vmax.f32 %v835, 0.0
    %v1014 = vmax.f32 %v838, 0.0
    %v1015 = vmax.f32 %v841, 0.0
    %v1016 = vmax.f32 %v844, 0.0
    %v1017 = vmax.f32 %v847, 0.0
    %v1018 = vmax.f32 %v850, 0.0
    %v1019 = vmax.f32 %v853, 0.0
    %v1020 = vmax.f32 %v856, 0.0
    %v1021 = vmax.f32 %v859, 0.0
    %v1022 = vmax.f32 %v862, 0.0
    %v1023 = vmax.f32 %v865, 0.0
    %v1024 = vmax.f32 %v868, 0.0
    %v1025 = vmax.f32 %v871, 0.0
    %v1026 = vmax.f32 %v874, 0.0
    %v1027 = vmax.f32 %v877, 0.0
    %v1028 = vmax.f32 %v880, 0.0
    %v1029 = vmax.f32 %v883, 0.0
    %v1030 = vmax.f32 %v886, 0.0
    %v1031 = vmax.f32 %v889, 0.0
    %v1032 = vmax.f32 %v892, 0.0
    %v1033 = vmax.f32 %v895, 0.0
    %v1034 = vmax.f32 %v898, 0.0
    %v1035 = vmax.f32 %v901, 0.0
    %v1036 = vmax.f32 %v904, 0.0
    %v1037 = vmax.f32 %v907, 0.0
    %v1038 = vmax.f32 %v910, 0.0
    %v1039 = vmax.f32 %v913, 0.0
    %v1040 = vld [vmem:[%s2] sm:$0xff]
    %v1041 = vld [vmem:[%s2 + $0x8] sm:$0xff]
    %v1042 = vld [vmem:[%s2 + $0x10] sm:$0xff]
    %v1043 = vld [vmem:[%s2 + $0x18] sm:$0xff]
    %v1044 = vld [vmem:[%s2 + $0x20] sm:$0xff]
    %v1045 = vld [vmem:[%s2 + $0x28] sm:$0xff]
    %v1046 = vld [vmem:[%s2 + $0x30] sm:$0xff]
    %v1047 = vld [vmem:[%s2 + $0x38] sm:$0xff]
    %v1048 = vld [vmem:[%s2 + $0x40] sm:$0xff]
    %v1049 = vld [vmem:[%s2 + $0x48] sm:$0xff]
    %v1050 = vld [vmem:[%s2 + $0x50] sm:$0xff]
    %v1051 = vld [vmem:[%s2 + $0x58] sm:$0xff]
    %v1052 = vld [vmem:[%s2 + $0x60] sm:$0xff]
    %v1053 = vld [vmem:[%s2 + $0x68] sm:$0xff]
    %v1054 = vld [vmem:[%s2 + $0x70] sm:$0xff]
    %v1055 = vld [vmem:[%s2 + $0x78] sm:$0xff]
    %v1056 = vld [vmem:[%s2 + $0x80] sm:$0x1]
    %v1057 = vperm.slane %v1056, 0
    %1058 = vmatpush.msra.mxu0 %v1055
    %1059 = vmatpush.msra.mxu0 %v1054
    %1060 = vmatpush.msra.mxu0 %v1053
    %1061 = vmatpush.msra.mxu0 %v1052
    %1062 = vmatpush.msra.mxu0 %v1051
    %1063 = vmatpush.msra.mxu0 %v1050
    %1064 = vmatpush.msra.mxu0 %v1049
    %1065 = vmatpush.msra.mxu0 %v1048
    %1066 = vmatpush.msra.mxu0 %v1047
    %1067 = vmatpush.msra.mxu0 %v1046
    %1068 = vmatpush.msra.mxu0 %v1045
    %1069 = vmatpush.msra.mxu0 %v1044
    %1070 = vmatpush.msra.mxu0 %v1043
    %1071 = vmatpush.msra.mxu0 %v1042
    %1072 = vmatpush.msra.mxu0 %v1041
    %1073 = vmatpush.msra.mxu0 %v1040
    %1074 = vmatmul.f32.gmra.mxu0 %v915
    %v1075 = vpop.f32.mrf.mxu0
    %v1076 = vadd.f32 %v1057, %v1075
    %1077 = vmatmul.f32.gmra.mxu0 %v916
    %v1078 = vpop.f32.mrf.mxu0
    %v1079 = vadd.f32 %v1057, %v1078
    %1080 = vmatmul.f32.gmra.mxu0 %v917
    %v1081 = vpop.f32.mrf.mxu0
    %v1082 = vadd.f32 %v1057, %v1081
    %1083 = vmatmul.f32.gmra.mxu0 %v918
    %v1084 = vpop.f32.mrf.mxu0
    %v1085 = vadd.f32 %v1057, %v1084
    %1086 = vmatmul.f32.gmra.mxu0 %v919
    %v1087 = vpop.f32.mrf.mxu0
    %v1088 = vadd.f32 %v1057, %v1087
    %1089 = vmatmul.f32.gmra.mxu0 %v920
    %v1090 = vpop.f32.mrf.mxu0
    %v1091 = vadd.f32 %v1057, %v1090
    %1092 = vmatmul.f32.gmra.mxu0 %v921
    %v1093 = vpop.f32.mrf.mxu0
    %v1094 = vadd.f32 %v1057, %v1093
    %1095 = vmatmul.f32.gmra.mxu0 %v922
    %v1096 = vpop.f32.mrf.mxu0
    %v1097 = vadd.f32 %v1057, %v1096
    %1098 = vmatmul.f32.gmra.mxu0 %v923
    %v1099 = vpop.f32.mrf.mxu0
    %v1100 = vadd.f32 %v1057, %v1099
    %1101 = vmatmul.f32.gmra.mxu0 %v924
    %v1102 = vpop.f32.mrf.mxu0
    %v1103 = vadd.f32 %v1057, %v1102
    %1104 = vmatmul.f32.gmra.mxu0 %v925
    %v1105 = vpop.f32.mrf.mxu0
    %v1106 = vadd.f32 %v1057, %v1105
    %1107 = vmatmul.f32.gmra.mxu0 %v926
    %v1108 = vpop.f32.mrf.mxu0
    %v1109 = vadd.f32 %v1057, %v1108
    %1110 = vmatmul.f32.gmra.mxu0 %v927
    %v1111 = vpop.f32.mrf.mxu0
    %v1112 = vadd.f32 %v1057, %v1111
    %1113 = vmatmul.f32.gmra.mxu0 %v928
    %v1114 = vpop.f32.mrf.mxu0
    %v1115 = vadd.f32 %v1057, %v1114
    %1116 = vmatmul.f32.gmra.mxu0 %v929
    %v1117 = vpop.f32.mrf.mxu0
    %v1118 = vadd.f32 %v1057, %v1117
    %1119 = vmatmul.f32.gmra.mxu0 %v930
    %v1120 = vpop.f32.mrf.mxu0
    %v1121 = vadd.f32 %v1057, %v1120
    %1122 = vmatmul.f32.gmra.mxu0 %v931
    %v1123 = vpop.f32.mrf.mxu0
    %v1124 = vadd.f32 %v1057, %v1123
    %1125 = vmatmul.f32.gmra.mxu0 %v932
    %v1126 = vpop.f32.mrf.mxu0
    %v1127 = vadd.f32 %v1057, %v1126
    %1128 = vmatmul.f32.gmra.mxu0 %v933
    %v1129 = vpop.f32.mrf.mxu0
    %v1130 = vadd.f32 %v1057, %v1129
    %1131 = vmatmul.f32.gmra.mxu0 %v934
    %v1132 = vpop.f32.mrf.mxu0
    %v1133 = vadd.f32 %v1057, %v1132
    %1134 = vmatmul.f32.gmra.mxu0 %v935
    %v1135 = vpop.f32.mrf.mxu0
    %v1136 = vadd.f32 %v1057, %v1135
    %1137 = vmatmul.f32.gmra.mxu0 %v936
    %v1138 = vpop.f32.mrf.mxu0
    %v1139 = vadd.f32 %v1057, %v1138
    %1140 = vmatmul.f32.gmra.mxu0 %v937
    %v1141 = vpop.f32.mrf.mxu0
    %v1142 = vadd.f32 %v1057, %v1141
    %1143 = vmatmul.f32.gmra.mxu0 %v938
    %v1144 = vpop.f32.mrf.mxu0
    %v1145 = vadd.f32 %v1057, %v1144
    %1146 = vmatmul.f32.gmra.mxu0 %v939
    %v1147 = vpop.f32.mrf.mxu0
    %v1148 = vadd.f32 %v1057, %v1147
    %1149 = vmatmul.f32.gmra.mxu0 %v940
    %v1150 = vpop.f32.mrf.mxu0
    %v1151 = vadd.f32 %v1057, %v1150
    %1152 = vmatmul.f32.gmra.mxu0 %v941
    %v1153 = vpop.f32.mrf.mxu0
    %v1154 = vadd.f32 %v1057, %v1153
    %1155 = vmatmul.f32.gmra.mxu0 %v942
    %v1156 = vpop.f32.mrf.mxu0
    %v1157 = vadd.f32 %v1057, %v1156
    %1158 = vmatmul.f32.gmra.mxu0 %v943
    %v1159 = vpop.f32.mrf.mxu0
    %v1160 = vadd.f32 %v1057, %v1159
    %1161 = vmatmul.f32.gmra.mxu0 %v944
    %v1162 = vpop.f32.mrf.mxu0
    %v1163 = vadd.f32 %v1057, %v1162
    %1164 = vmatmul.f32.gmra.mxu0 %v945
    %v1165 = vpop.f32.mrf.mxu0
    %v1166 = vadd.f32 %v1057, %v1165
    %1167 = vmatmul.f32.gmra.mxu0 %v946
    %v1168 = vpop.f32.mrf.mxu0
    %v1169 = vadd.f32 %v1057, %v1168
    %1170 = vmatmul.f32.gmra.mxu0 %v947
    %v1171 = vpop.f32.mrf.mxu0
    %v1172 = vadd.f32 %v1057, %v1171
    %1173 = vmatmul.f32.gmra.mxu0 %v948
    %v1174 = vpop.f32.mrf.mxu0
    %v1175 = vadd.f32 %v1057, %v1174
    %1176 = vmatmul.f32.gmra.mxu0 %v949
    %v1177 = vpop.f32.mrf.mxu0
    %v1178 = vadd.f32 %v1057, %v1177
    %1179 = vmatmul.f32.gmra.mxu0 %v950
    %v1180 = vpop.f32.mrf.mxu0
    %v1181 = vadd.f32 %v1057, %v1180
    %1182 = vmatmul.f32.gmra.mxu0 %v951
    %v1183 = vpop.f32.mrf.mxu0
    %v1184 = vadd.f32 %v1057, %v1183
    %1185 = vmatmul.f32.gmra.mxu0 %v952
    %v1186 = vpop.f32.mrf.mxu0
    %v1187 = vadd.f32 %v1057, %v1186
    %1188 = vmatmul.f32.gmra.mxu0 %v953
    %v1189 = vpop.f32.mrf.mxu0
    %v1190 = vadd.f32 %v1057, %v1189
    %1191 = vmatmul.f32.gmra.mxu0 %v954
    %v1192 = vpop.f32.mrf.mxu0
    %v1193 = vadd.f32 %v1057, %v1192
    %1194 = vmatmul.f32.gmra.mxu0 %v955
    %v1195 = vpop.f32.mrf.mxu0
    %v1196 = vadd.f32 %v1057, %v1195
    %1197 = vmatmul.f32.gmra.mxu0 %v956
    %v1198 = vpop.f32.mrf.mxu0
    %v1199 = vadd.f32 %v1057, %v1198
    %1200 = vmatmul.f32.gmra.mxu0 %v957
    %v1201 = vpop.f32.mrf.mxu0
    %v1202 = vadd.f32 %v1057, %v1201
    %1203 = vmatmul.f32.gmra.mxu0 %v958
    %v1204 = vpop.f32.mrf.mxu0
    %v1205 = vadd.f32 %v1057, %v1204
    %1206 = vmatmul.f32.gmra.mxu0 %v959
    %v1207 = vpop.f32.mrf.mxu0
    %v1208 = vadd.f32 %v1057, %v1207
    %1209 = vmatmul.f32.gmra.mxu0 %v960
    %v1210 = vpop.f32.mrf.mxu0
    %v1211 = vadd.f32 %v1057, %v1210
    %1212 = vmatmul.f32.gmra.mxu0 %v961
    %v1213 = vpop.f32.mrf.mxu0
    %v1214 = vadd.f32 %v1057, %v1213
    %1215 = vmatmul.f32.gmra.mxu0 %v962
    %v1216 = vpop.f32.mrf.mxu0
    %v1217 = vadd.f32 %v1057, %v1216
    %1218 = vmatmul.f32.gmra.mxu0 %v963
    %v1219 = vpop.f32.mrf.mxu0
    %v1220 = vadd.f32 %v1057, %v1219
    %1221 = vmatmul.f32.gmra.mxu0 %v964
    %v1222 = vpop.f32.mrf.mxu0
    %v1223 = vadd.f32 %v1057, %v1222
    %1224 = vmatmul.f32.gmra.mxu0 %v965
    %v1225 = vpop.f32.mrf.mxu0
    %v1226 = vadd.f32 %v1057, %v1225
    %1227 = vmatmul.f32.gmra.mxu0 %v966
    %v1228 = vpop.f32.mrf.mxu0
    %v1229 = vadd.f32 %v1057, %v1228
    %1230 = vmatmul.f32.gmra.mxu0 %v967
    %v1231 = vpop.f32.mrf.mxu0
    %v1232 = vadd.f32 %v1057, %v1231
    %1233 = vmatmul.f32.gmra.mxu0 %v968
    %v1234 = vpop.f32.mrf.mxu0
    %v1235 = vadd.f32 %v1057, %v1234
    %1236 = vmatmul.f32.gmra.mxu0 %v969
    %v1237 = vpop.f32.mrf.mxu0
    %v1238 = vadd.f32 %v1057, %v1237
    %1239 = vmatmul.f32.gmra.mxu0 %v970
    %v1240 = vpop.f32.mrf.mxu0
    %v1241 = vadd.f32 %v1057, %v1240
    %1242 = vmatmul.f32.gmra.mxu0 %v971
    %v1243 = vpop.f32.mrf.mxu0
    %v1244 = vadd.f32 %v1057, %v1243
    %1245 = vmatmul.f32.gmra.mxu0 %v972
    %v1246 = vpop.f32.mrf.mxu0
    %v1247 = vadd.f32 %v1057, %v1246
    %1248 = vmatmul.f32.gmra.mxu0 %v973
    %v1249 = vpop.f32.mrf.mxu0
    %v1250 = vadd.f32 %v1057, %v1249
    %1251 = vmatmul.f32.gmra.mxu0 %v974
    %v1252 = vpop.f32.mrf.mxu0
    %v1253 = vadd.f32 %v1057, %v1252
    %1254 = vmatmul.f32.gmra.mxu0 %v975
    %v1255 = vpop.f32.mrf.mxu0
    %v1256 = vadd.f32 %v1057, %v1255
    %1257 = vmatmul.f32.gmra.mxu0 %v976
    %v1258 = vpop.f32.mrf.mxu0
    %v1259 = vadd.f32 %v1057, %v1258
    %1260 = vmatmul.f32.gmra.mxu0 %v977
    %v1261 = vpop.f32.mrf.mxu0
    %v1262 = vadd.f32 %v1057, %v1261
    %1263 = vmatmul.f32.gmra.mxu0 %v978
    %v1264 = vpop.f32.mrf.mxu0
    %v1265 = vadd.f32 %v1057, %v1264
    %1266 = vmatmul.f32.gmra.mxu0 %v979
    %v1267 = vpop.f32.mrf.mxu0
    %v1268 = vadd.f32 %v1057, %v1267
    %1269 = vmatmul.f32.gmra.mxu0 %v980
    %v1270 = vpop.f32.mrf.mxu0
    %v1271 = vadd.f32 %v1057, %v1270
    %1272 = vmatmul.f32.gmra.mxu0 %v981
    %v1273 = vpop.f32.mrf.mxu0
    %v1274 = vadd.f32 %v1057, %v1273
    %1275 = vmatmul.f32.gmra.mxu0 %v982
    %v1276 = vpop.f32.mrf.mxu0
    %v1277 = vadd.f32 %v1057, %v1276
    %1278 = vmatmul.f32.gmra.mxu0 %v983
    %v1279 = vpop.f32.mrf.mxu0
    %v1280 = vadd.f32 %v1057, %v1279
    %1281 = vmatmul.f32.gmra.mxu0 %v984
    %v1282 = vpop.f32.mrf.mxu0
    %v1283 = vadd.f32 %v1057, %v1282
    %1284 = vmatmul.f32.gmra.mxu0 %v985
    %v1285 = vpop.f32.mrf.mxu0
    %v1286 = vadd.f32 %v1057, %v1285
    %1287 = vmatmul.f32.gmra.mxu0 %v986
    %v1288 = vpop.f32.mrf.mxu0
    %v1289 = vadd.f32 %v1057, %v1288
    %1290 = vmatmul.f32.gmra.mxu0 %v987
    %v1291 = vpop.f32.mrf.mxu0
    %v1292 = vadd.f32 %v1057, %v1291
    %1293 = vmatmul.f32.gmra.mxu0 %v988
    %v1294 = vpop.f32.mrf.mxu0
    %v1295 = vadd.f32 %v1057, %v1294
    %1296 = vmatmul.f32.gmra.mxu0 %v989
    %v1297 = vpop.f32.mrf.mxu0
    %v1298 = vadd.f32 %v1057, %v1297
    %1299 = vmatmul.f32.gmra.mxu0 %v990
    %v1300 = vpop.f32.mrf.mxu0
    %v1301 = vadd.f32 %v1057, %v1300
    %1302 = vmatmul.f32.gmra.mxu0 %v991
    %v1303 = vpop.f32.mrf.mxu0
    %v1304 = vadd.f32 %v1057, %v1303
    %1305 = vmatmul.f32.gmra.mxu0 %v992
    %v1306 = vpop.f32.mrf.mxu0
    %v1307 = vadd.f32 %v1057, %v1306
    %1308 = vmatmul.f32.gmra.mxu0 %v993
    %v1309 = vpop.f32.mrf.mxu0
    %v1310 = vadd.f32 %v1057, %v1309
    %1311 = vmatmul.f32.gmra.mxu0 %v994
    %v1312 = vpop.f32.mrf.mxu0
    %v1313 = vadd.f32 %v1057, %v1312
    %1314 = vmatmul.f32.gmra.mxu0 %v995
    %v1315 = vpop.f32.mrf.mxu0
    %v1316 = vadd.f32 %v1057, %v1315
    %1317 = vmatmul.f32.gmra.mxu0 %v996
    %v1318 = vpop.f32.mrf.mxu0
    %v1319 = vadd.f32 %v1057, %v1318
    %1320 = vmatmul.f32.gmra.mxu0 %v997
    %v1321 = vpop.f32.mrf.mxu0
    %v1322 = vadd.f32 %v1057, %v1321
    %1323 = vmatmul.f32.gmra.mxu0 %v998
    %v1324 = vpop.f32.mrf.mxu0
    %v1325 = vadd.f32 %v1057, %v1324
    %1326 = vmatmul.f32.gmra.mxu0 %v999
    %v1327 = vpop.f32.mrf.mxu0
    %v1328 = vadd.f32 %v1057, %v1327
    %1329 = vmatmul.f32.gmra.mxu0 %v1000
    %v1330 = vpop.f32.mrf.mxu0
    %v1331 = vadd.f32 %v1057, %v1330
    %1332 = vmatmul.f32.gmra.mxu0 %v1001
    %v1333 = vpop.f32.mrf.mxu0
    %v1334 = vadd.f32 %v1057, %v1333
    %1335 = vmatmul.f32.gmra.mxu0 %v1002
    %v1336 = vpop.f32.mrf.mxu0
    %v1337 = vadd.f32 %v1057, %v1336
    %1338 = vmatmul.f32.gmra.mxu0 %v1003
    %v1339 = vpop.f32.mrf.mxu0
    %v1340 = vadd.f32 %v1057, %v1339
    %1341 = vmatmul.f32.gmra.mxu0 %v1004
    %v1342 = vpop.f32.mrf.mxu0
    %v1343 = vadd.f32 %v1057, %v1342
    %1344 = vmatmul.f32.gmra.mxu0 %v1005
    %v1345 = vpop.f32.mrf.mxu0
    %v1346 = vadd.f32 %v1057, %v1345
    %1347 = vmatmul.f32.gmra.mxu0 %v1006
    %v1348 = vpop.f32.mrf.mxu0
    %v1349 = vadd.f32 %v1057, %v1348
    %1350 = vmatmul.f32.gmra.mxu0 %v1007
    %v1351 = vpop.f32.mrf.mxu0
    %v1352 = vadd.f32 %v1057, %v1351
    %1353 = vmatmul.f32.gmra.mxu0 %v1008
    %v1354 = vpop.f32.mrf.mxu0
    %v1355 = vadd.f32 %v1057, %v1354
    %1356 = vmatmul.f32.gmra.mxu0 %v1009
    %v1357 = vpop.f32.mrf.mxu0
    %v1358 = vadd.f32 %v1057, %v1357
    %1359 = vmatmul.f32.gmra.mxu0 %v1010
    %v1360 = vpop.f32.mrf.mxu0
    %v1361 = vadd.f32 %v1057, %v1360
    %1362 = vmatmul.f32.gmra.mxu0 %v1011
    %v1363 = vpop.f32.mrf.mxu0
    %v1364 = vadd.f32 %v1057, %v1363
    %1365 = vmatmul.f32.gmra.mxu0 %v1012
    %v1366 = vpop.f32.mrf.mxu0
    %v1367 = vadd.f32 %v1057, %v1366
    %1368 = vmatmul.f32.gmra.mxu0 %v1013
    %v1369 = vpop.f32.mrf.mxu0
    %v1370 = vadd.f32 %v1057, %v1369
    %1371 = vmatmul.f32.gmra.mxu0 %v1014
    %v1372 = vpop.f32.mrf.mxu0
    %v1373 = vadd.f32 %v1057, %v1372
    %1374 = vmatmul.f32.gmra.mxu0 %v1015
    %v1375 = vpop.f32.mrf.mxu0
    %v1376 = vadd.f32 %v1057, %v1375
    %1377 = vmatmul.f32.gmra.mxu0 %v1016
    %v1378 = vpop.f32.mrf.mxu0
    %v1379 = vadd.f32 %v1057, %v1378
    %1380 = vmatmul.f32.gmra.mxu0 %v1017
    %v1381 = vpop.f32.mrf.mxu0
    %v1382 = vadd.f32 %v1057, %v1381
    %1383 = vmatmul.f32.gmra.mxu0 %v1018
    %v1384 = vpop.f32.mrf.mxu0
    %v1385 = vadd.f32 %v1057, %v1384
    %1386 = vmatmul.f32.gmra.mxu0 %v1019
    %v1387 = vpop.f32.mrf.mxu0
    %v1388 = vadd.f32 %v1057, %v1387
    %1389 = vmatmul.f32.gmra.mxu0 %v1020
    %v1390 = vpop.f32.mrf.mxu0
    %v1391 = vadd.f32 %v1057, %v1390
    %1392 = vmatmul.f32.gmra.mxu0 %v1021
    %v1393 = vpop.f32.mrf.mxu0
    %v1394 = vadd.f32 %v1057, %v1393
    %1395 = vmatmul.f32.gmra.mxu0 %v1022
    %v1396 = vpop.f32.mrf.mxu0
    %v1397 = vadd.f32 %v1057, %v1396
    %1398 = vmatmul.f32.gmra.mxu0 %v1023
    %v1399 = vpop.f32.mrf.mxu0
    %v1400 = vadd.f32 %v1057, %v1399
    %1401 = vmatmul.f32.gmra.mxu0 %v1024
    %v1402 = vpop.f32.mrf.mxu0
    %v1403 = vadd.f32 %v1057, %v1402
    %1404 = vmatmul.f32.gmra.mxu0 %v1025
    %v1405 = vpop.f32.mrf.mxu0
    %v1406 = vadd.f32 %v1057, %v1405
    %1407 = vmatmul.f32.gmra.mxu0 %v1026
    %v1408 = vpop.f32.mrf.mxu0
    %v1409 = vadd.f32 %v1057, %v1408
    %1410 = vmatmul.f32.gmra.mxu0 %v1027
    %v1411 = vpop.f32.mrf.mxu0
    %v1412 = vadd.f32 %v1057, %v1411
    %1413 = vmatmul.f32.gmra.mxu0 %v1028
    %v1414 = vpop.f32.mrf.mxu0
    %v1415 = vadd.f32 %v1057, %v1414
    %1416 = vmatmul.f32.gmra.mxu0 %v1029
    %v1417 = vpop.f32.mrf.mxu0
    %v1418 = vadd.f32 %v1057, %v1417
    %1419 = vmatmul.f32.gmra.mxu0 %v1030
    %v1420 = vpop.f32.mrf.mxu0
    %v1421 = vadd.f32 %v1057, %v1420
    %1422 = vmatmul.f32.gmra.mxu0 %v1031
    %v1423 = vpop.f32.mrf.mxu0
    %v1424 = vadd.f32 %v1057, %v1423
    %1425 = vmatmul.f32.gmra.mxu0 %v1032
    %v1426 = vpop.f32.mrf.mxu0
    %v1427 = vadd.f32 %v1057, %v1426
    %1428 = vmatmul.f32.gmra.mxu0 %v1033
    %v1429 = vpop.f32.mrf.mxu0
    %v1430 = vadd.f32 %v1057, %v1429
    %1431 = vmatmul.f32.gmra.mxu0 %v1034
    %v1432 = vpop.f32.mrf.mxu0
    %v1433 = vadd.f32 %v1057, %v1432
    %1434 = vmatmul.f32.gmra.mxu0 %v1035
    %v1435 = vpop.f32.mrf.mxu0
    %v1436 = vadd.f32 %v1057, %v1435
    %1437 = vmatmul.f32.gmra.mxu0 %v1036
    %v1438 = vpop.f32.mrf.mxu0
    %v1439 = vadd.f32 %v1057, %v1438
    %1440 = vmatmul.f32.gmra.mxu0 %v1037
    %v1441 = vpop.f32.mrf.mxu0
    %v1442 = vadd.f32 %v1057, %v1441
    %1443 = vmatmul.f32.gmra.mxu0 %v1038
    %v1444 = vpop.f32.mrf.mxu0
    %v1445 = vadd.f32 %v1057, %v1444
    %1446 = vmatmul.f32.gmra.mxu0 %v1039
    %v1447 = vpop.f32.mrf.mxu0
    %v1448 = vadd.f32 %v1057, %v1447
    %1449 = vdwg.mxu0
    %1450 = vst [vmem:[#allocation2] sm:$0xff] %v1076
    %1451 = vst [vmem:[#allocation2 + $0x8] sm:$0xff] %v1079
    %1452 = vst [vmem:[#allocation2 + $0x10] sm:$0xff] %v1082
    %1453 = vst [vmem:[#allocation2 + $0x18] sm:$0xff] %v1085
    %1454 = vst [vmem:[#allocation2 + $0x20] sm:$0xff] %v1088
    %1455 = vst [vmem:[#allocation2 + $0x28] sm:$0xff] %v1091
    %1456 = vst [vmem:[#allocation2 + $0x30] sm:$0xff] %v1094
    %1457 = vst [vmem:[#allocation2 + $0x38] sm:$0xff] %v1097
    %1458 = vst [vmem:[#allocation2 + $0x40] sm:$0xff] %v1100
    %1459 = vst [vmem:[#allocation2 + $0x48] sm:$0xff] %v1103
    %1460 = vst [vmem:[#allocation2 + $0x50] sm:$0xff] %v1106
    %1461 = vst [vmem:[#allocation2 + $0x58] sm:$0xff] %v1109
    %1462 = vst [vmem:[#allocation2 + $0x60] sm:$0xff] %v1112
    %1463 = vst [vmem:[#allocation2 + $0x68] sm:$0xff] %v1115
    %1464 = vst [vmem:[#allocation2 + $0x70] sm:$0xff] %v1118
    %1465 = vst [vmem:[#allocation2 + $0x78] sm:$0xff] %v1121
    %1466 = vst [vmem:[#allocation2 + $0x80] sm:$0xff] %v1124
    %1467 = vst [vmem:[#allocation2 + $0x88] sm:$0xff] %v1127
    %1468 = vst [vmem:[#allocation2 + $0x90] sm:$0xff] %v1130
    %1469 = vst [vmem:[#allocation2 + $0x98] sm:$0xff] %v1133
    %1470 = vst [vmem:[#allocation2 + $0xa0] sm:$0xff] %v1136
    %1471 = vst [vmem:[#allocation2 + $0xa8] sm:$0xff] %v1139
    %1472 = vst [vmem:[#allocation2 + $0xb0] sm:$0xff] %v1142
    %1473 = vst [vmem:[#allocation2 + $0xb8] sm:$0xff] %v1145
    %1474 = vst [vmem:[#allocation2 + $0xc0] sm:$0xff] %v1148
    %1475 = vst [vmem:[#allocation2 + $0xc8] sm:$0xff] %v1151
    %1476 = vst [vmem:[#allocation2 + $0xd0] sm:$0xff] %v1154
    %1477 = vst [vmem:[#allocation2 + $0xd8] sm:$0xff] %v1157
    %1478 = vst [vmem:[#allocation2 + $0xe0] sm:$0xff] %v1160
    %1479 = vst [vmem:[#allocation2 + $0xe8] sm:$0xff] %v1163
    %1480 = vst [vmem:[#allocation2 + $0xf0] sm:$0xff] %v1166
    %1481 = vst [vmem:[#allocation2 + $0xf8] sm:$0xff] %v1169
    %1482 = vst [vmem:[#allocation2 + $0x100] sm:$0xff] %v1172
    %1483 = vst [vmem:[#allocation2 + $0x108] sm:$0xff] %v1175
    %1484 = vst [vmem:[#allocation2 + $0x110] sm:$0xff] %v1178
    %1485 = vst [vmem:[#allocation2 + $0x118] sm:$0xff] %v1181
    %1486 = vst [vmem:[#allocation2 + $0x120] sm:$0xff] %v1184
    %1487 = vst [vmem:[#allocation2 + $0x128] sm:$0xff] %v1187
    %1488 = vst [vmem:[#allocation2 + $0x130] sm:$0xff] %v1190
    %1489 = vst [vmem:[#allocation2 + $0x138] sm:$0xff] %v1193
    %1490 = vst [vmem:[#allocation2 + $0x140] sm:$0xff] %v1196
    %1491 = vst [vmem:[#allocation2 + $0x148] sm:$0xff] %v1199
    %1492 = vst [vmem:[#allocation2 + $0x150] sm:$0xff] %v1202
    %1493 = vst [vmem:[#allocation2 + $0x158] sm:$0xff] %v1205
    %1494 = vst [vmem:[#allocation2 + $0x160] sm:$0xff] %v1208
    %1495 = vst [vmem:[#allocation2 + $0x168] sm:$0xff] %v1211
    %1496 = vst [vmem:[#allocation2 + $0x170] sm:$0xff] %v1214
    %1497 = vst [vmem:[#allocation2 + $0x178] sm:$0xff] %v1217
    %1498 = vst [vmem:[#allocation2 + $0x180] sm:$0xff] %v1220
    %1499 = vst [vmem:[#allocation2 + $0x188] sm:$0xff] %v1223
    %1500 = vst [vmem:[#allocation2 + $0x190] sm:$0xff] %v1226
    %1501 = vst [vmem:[#allocation2 + $0x198] sm:$0xff] %v1229
    %1502 = vst [vmem:[#allocation2 + $0x1a0] sm:$0xff] %v1232
    %1503 = vst [vmem:[#allocation2 + $0x1a8] sm:$0xff] %v1235
    %1504 = vst [vmem:[#allocation2 + $0x1b0] sm:$0xff] %v1238
    %1505 = vst [vmem:[#allocation2 + $0x1b8] sm:$0xff] %v1241
    %1506 = vst [vmem:[#allocation2 + $0x1c0] sm:$0xff] %v1244
    %1507 = vst [vmem:[#allocation2 + $0x1c8] sm:$0xff] %v1247
    %1508 = vst [vmem:[#allocation2 + $0x1d0] sm:$0xff] %v1250
    %1509 = vst [vmem:[#allocation2 + $0x1d8] sm:$0xff] %v1253
    %1510 = vst [vmem:[#allocation2 + $0x1e0] sm:$0xff] %v1256
    %1511 = vst [vmem:[#allocation2 + $0x1e8] sm:$0xff] %v1259
    %1512 = vst [vmem:[#allocation2 + $0x1f0] sm:$0xff] %v1262
    %1513 = vst [vmem:[#allocation2 + $0x1f8] sm:$0xff] %v1265
    %1514 = vst [vmem:[#allocation2 + $0x200] sm:$0xff] %v1268
    %1515 = vst [vmem:[#allocation2 + $0x208] sm:$0xff] %v1271
    %1516 = vst [vmem:[#allocation2 + $0x210] sm:$0xff] %v1274
    %1517 = vst [vmem:[#allocation2 + $0x218] sm:$0xff] %v1277
    %1518 = vst [vmem:[#allocation2 + $0x220] sm:$0xff] %v1280
    %1519 = vst [vmem:[#allocation2 + $0x228] sm:$0xff] %v1283
    %1520 = vst [vmem:[#allocation2 + $0x230] sm:$0xff] %v1286
    %1521 = vst [vmem:[#allocation2 + $0x238] sm:$0xff] %v1289
    %1522 = vst [vmem:[#allocation2 + $0x240] sm:$0xff] %v1292
    %1523 = vst [vmem:[#allocation2 + $0x248] sm:$0xff] %v1295
    %1524 = vst [vmem:[#allocation2 + $0x250] sm:$0xff] %v1298
    %1525 = vst [vmem:[#allocation2 + $0x258] sm:$0xff] %v1301
    %1526 = vst [vmem:[#allocation2 + $0x260] sm:$0xff] %v1304
    %1527 = vst [vmem:[#allocation2 + $0x268] sm:$0xff] %v1307
    %1528 = vst [vmem:[#allocation2 + $0x270] sm:$0xff] %v1310
    %1529 = vst [vmem:[#allocation2 + $0x278] sm:$0xff] %v1313
    %1530 = vst [vmem:[#allocation2 + $0x280] sm:$0xff] %v1316
    %1531 = vst [vmem:[#allocation2 + $0x288] sm:$0xff] %v1319
    %1532 = vst [vmem:[#allocation2 + $0x290] sm:$0xff] %v1322
    %1533 = vst [vmem:[#allocation2 + $0x298] sm:$0xff] %v1325
    %1534 = vst [vmem:[#allocation2 + $0x2a0] sm:$0xff] %v1328
    %1535 = vst [vmem:[#allocation2 + $0x2a8] sm:$0xff] %v1331
    %1536 = vst [vmem:[#allocation2 + $0x2b0] sm:$0xff] %v1334
    %1537 = vst [vmem:[#allocation2 + $0x2b8] sm:$0xff] %v1337
    %1538 = vst [vmem:[#allocation2 + $0x2c0] sm:$0xff] %v1340
    %1539 = vst [vmem:[#allocation2 + $0x2c8] sm:$0xff] %v1343
    %1540 = vst [vmem:[#allocation2 + $0x2d0] sm:$0xff] %v1346
    %1541 = vst [vmem:[#allocation2 + $0x2d8] sm:$0xff] %v1349
    %1542 = vst [vmem:[#allocation2 + $0x2e0] sm:$0xff] %v1352
    %1543 = vst [vmem:[#allocation2 + $0x2e8] sm:$0xff] %v1355
    %1544 = vst [vmem:[#allocation2 + $0x2f0] sm:$0xff] %v1358
    %1545 = vst [vmem:[#allocation2 + $0x2f8] sm:$0xff] %v1361
    %1546 = vst [vmem:[#allocation2 + $0x300] sm:$0xff] %v1364
    %1547 = vst [vmem:[#allocation2 + $0x308] sm:$0xff] %v1367
    %1548 = vst [vmem:[#allocation2 + $0x310] sm:$0xff] %v1370
    %1549 = vst [vmem:[#allocation2 + $0x318] sm:$0xff] %v1373
    %1550 = vst [vmem:[#allocation2 + $0x320] sm:$0xff] %v1376
    %1551 = vst [vmem:[#allocation2 + $0x328] sm:$0xff] %v1379
    %1552 = vst [vmem:[#allocation2 + $0x330] sm:$0xff] %v1382
    %1553 = vst [vmem:[#allocation2 + $0x338] sm:$0xff] %v1385
    %1554 = vst [vmem:[#allocation2 + $0x340] sm:$0xff] %v1388
    %1555 = vst [vmem:[#allocation2 + $0x348] sm:$0xff] %v1391
    %1556 = vst [vmem:[#allocation2 + $0x350] sm:$0xff] %v1394
    %1557 = vst [vmem:[#allocation2 + $0x358] sm:$0xff] %v1397
    %1558 = vst [vmem:[#allocation2 + $0x360] sm:$0xff] %v1400
    %1559 = vst [vmem:[#allocation2 + $0x368] sm:$0xff] %v1403
    %1560 = vst [vmem:[#allocation2 + $0x370] sm:$0xff] %v1406
    %1561 = vst [vmem:[#allocation2 + $0x378] sm:$0xff] %v1409
    %1562 = vst [vmem:[#allocation2 + $0x380] sm:$0xff] %v1412
    %1563 = vst [vmem:[#allocation2 + $0x388] sm:$0xff] %v1415
    %1564 = vst [vmem:[#allocation2 + $0x390] sm:$0xff] %v1418
    %1565 = vst [vmem:[#allocation2 + $0x398] sm:$0xff] %v1421
    %1566 = vst [vmem:[#allocation2 + $0x3a0] sm:$0xff] %v1424
    %1567 = vst [vmem:[#allocation2 + $0x3a8] sm:$0xff] %v1427
    %1568 = vst [vmem:[#allocation2 + $0x3b0] sm:$0xff] %v1430
    %1569 = vst [vmem:[#allocation2 + $0x3b8] sm:$0xff] %v1433
    %1570 = vst [vmem:[#allocation2 + $0x3c0] sm:$0xff] %v1436
    %1571 = vst [vmem:[#allocation2 + $0x3c8] sm:$0xff] %v1439
    %1572 = vst [vmem:[#allocation2 + $0x3d0] sm:$0xff] %v1442
    %1573 = vst [vmem:[#allocation2 + $0x3d8] sm:$0xff] %v1445
    %1574 = vst [vmem:[#allocation2 + $0x3e0] sm:$0xff] %v1448
    // Predicated region
    $region14: #{tpu_custom_call.1} parent=1 // pred_check
      _
    $region15: #{tpu_custom_call.1} parent=1 // pred_check_branch
      %1576 = sbr.rel (0) target = $region17
    $region16: #{tpu_custom_call.1} parent=1 // pred_region
      %1578 = vsyncadd [#allocation3], 0
      %s1579 = sshll.u32 [#allocation2], 4
      %s1580 = int_to_ptr.vmem [resolvable:$true] %s1579
      %s1581 = sshll.u32 %s3, 4
      %s1582 = int_to_ptr.hbm [resolvable:$true] %s1581
      %1587 = dma.vmem_to_hbm [thread:$0]  %s1580, 16000, %s1582, [#allocation3], 128, 128, 8
    $region17: #{tpu_custom_call.1} parent=1 // pred_fallthru
      _
    // Predicated region
    $region18: #{tpu_custom_call.1} parent=1 // pred_check
      _
    $region19: #{tpu_custom_call.1} parent=1 // pred_check_branch
      %1589 = sbr.rel (0) target = $region21
    $region20: #{tpu_custom_call.1} parent=1 // pred_region
      %1591 = dma.done [#allocation3], 16000
    $region21: #{tpu_custom_call.1} parent=1 // pred_fallthru
      _
    %1592 = vsyncpa [#allocation3], 1

</llo_original>
